<compile_context>
chip_gen: v5e
topology: v5e:2x2
jax: 0.10.0
libtpu: 0.0.40
codegen_flags: <defaults>
</compile_context>

<pallas_src>
import functools

import jax
import jax.numpy as jnp
from jax.experimental import pallas as pl
from jax.experimental.pallas import tpu as pltpu


def _mha_kernel(x_ref, wqkv_ref, bqkv_ref, wo_ref, bo_ref, o_ref, *,
                num_heads, batch, seq_len):
    """Fused multi-head self-attention over the whole batch, single invocation.

    x_ref    : (B*L, E)   flattened (batch, seq) rows
    wqkv_ref : (E, 3E)    pre-transposed, fused [Wq^T * scale | Wk^T | Wv^T]
    bqkv_ref : (1, 3E)    fused [bq * scale | bk | bv]
    wo_ref   : (E, E)     pre-transposed Wo^T
    bo_ref   : (1, E)
    o_ref    : ((B*L*E)//128, 128) lane-dense, or (B*L, E) fallback
    """
    x = x_ref[...].astype(jnp.float32)                         # (BL, E)
    E = x.shape[-1]
    hd = E // num_heads
    BL = batch * seq_len

    # One fused QKV projection for every (batch, seq) row.  The 1/sqrt(hd) scale is
    # already folded into the Wq / bq blocks (parameter-packing time).
    qkv = jnp.dot(x, wqkv_ref[...],
                  preferred_element_type=jnp.float32) + bqkv_ref[...]   # (BL, 3E)

    # Stack heads along the (major) einsum batch dimension so ALL heads flow through a
    # single pair of batched einsums (one MXU stream) instead of a per-head loop of
    # tiny matmuls.  Only major-dim reshapes and axis-0 concatenation are used here
    # (no cross-lane relayout beyond the unavoidable per-head column slice).
    def head_stack(which):                                      # which: 0=q, 1=k, 2=v
        blocks = [
            qkv[:, which * E + h * hd: which * E + (h + 1) * hd]
            .reshape(batch, seq_len, hd)
            for h in range(num_heads)
        ]
        return jnp.concatenate(blocks, axis=0)                  # (H*B, L, hd), idx = h*B + b

    q = head_stack(0)
    k = head_stack(1)
    v = head_stack(2)

    s = jnp.einsum("bqd,bkd->bqk", q, k,
                   preferred_element_type=jnp.float32)          # (H*B, L, L)
    s = s - jnp.max(s, axis=-1, keepdims=True)
    p = jnp.exp(s)
    l = jnp.sum(p, axis=-1, keepdims=True)
    inv = pl.reciprocal(l, approx=True)                         # EUP slot
    inv = inv * (2.0 - l * inv)                                 # Newton step -> f32 accurate
    p = p * inv

    o = jnp.einsum("bqk,bkd->bqd", p, v,
                   preferred_element_type=jnp.float32)          # (H*B, L, hd)

    # Re-assemble the torch head-major layout (BL, E) with ONE lane concat, then do a
    # SINGLE output-projection matmul with the full Wo^T (no per-head partial dots,
    # no zeros-init accumulator).
    o_cat = jnp.concatenate(
        [o[h * batch:(h + 1) * batch].reshape(BL, hd) for h in range(num_heads)],
        axis=-1)                                                # (BL, E)
    out = jnp.dot(o_cat, wo_ref[...],
                  preferred_element_type=jnp.float32) + bo_ref[...]

    # o_ref is lane-dense ((BL*E)//128, 128) when possible so the store is an unmasked
    # dense slab; in the fallback case o_ref is (BL, E) and this reshape is identity.
    o_ref[...] = out.reshape(o_ref.shape).astype(o_ref.dtype)


def pack_mha_params(params, num_heads):
    """One-time parameter preparation (hoisted out of the per-call wrapper).

    Fuses + pre-transposes the QKV projection, folds the 1/sqrt(head_dim) attention
    scale into the Wq / bq blocks, and pre-transposes the output projection.
    """
    E = params["wq"].shape[0]
    hd = E // num_heads
    scale = 1.0 / jnp.sqrt(jnp.float32(hd))
    wqkv_t = jnp.concatenate(
        [(params["wq"] * scale).T, params["wk"].T, params["wv"].T], axis=1)    # (E, 3E)
    bqkv = jnp.concatenate(
        [params["bq"] * scale, params["bk"], params["bv"]], axis=1)            # (1, 3E)
    return dict(wqkv_t=wqkv_t, bqkv=bqkv, wo_t=params["wo"].T, bo=params["bo"])


def self_attention_block_pallas(x, packed, *, embed_size, target_length,
                                target_compression_length, num_heads):
    assert target_length % target_compression_length == 0, \
        "target_length must be divisible by target_compression_length"
    each_comp = target_length // target_compression_length
    E = embed_size * each_comp
    L = target_compression_length
    assert E % num_heads == 0, "embed_dim must be divisible by num_heads"

    # Glue reshapes exactly as in the torch forward, then flatten batch into rows.
    xr = x.reshape((-1, L, E))
    B = xr.shape[0]
    x2 = xr.reshape((B * L, E)).astype(jnp.float32)

    kernel = functools.partial(_mha_kernel, num_heads=num_heads,
                               batch=B, seq_len=L)
    vmem = pl.BlockSpec(memory_space=pltpu.MemorySpace.VMEM)    # full array, no grid

    def run(out_shape2d):
        return pl.pallas_call(
            kernel,
            out_shape=jax.ShapeDtypeStruct(out_shape2d, jnp.float32),
            in_specs=[vmem, vmem, vmem, vmem, vmem],
            out_specs=vmem,
        )(x2, packed["wqkv_t"], packed["bqkv"], packed["wo_t"], packed["bo"])

    total = B * L * E
    if total % 128 == 0:
        # Preferred: lane-dense output (unmasked stores / dense writeback).
        try:
            out2d = run((total // 128, 128))
        except Exception:
            # Fallback if this Mosaic build cannot lower the minor-dim reshape.
            out2d = run((B * L, E))
    else:
        out2d = run((B * L, E))

    # final reshape as in torch: (B, -1, embed_size)
    return out2d.reshape((B, -1, embed_size))


def _reference_mha(x, params, *, embed_size, target_length,
                   target_compression_length, num_heads):
    """Pure-JAX reference mirroring torch.nn.MultiheadAttention forward."""
    each_comp = target_length // target_compression_length
    E = embed_size * each_comp
    L = target_compression_length
    xr = x.reshape((-1, L, E)).astype(jnp.float32)
    B = xr.shape[0]
    hd = E // num_heads

    q = xr @ params["wq"].T + params["bq"][0]
    k = xr @ params["wk"].T + params["bk"][0]
    v = xr @ params["wv"].T + params["bv"][0]

    def split(t):  # (B, L, E) -> (B, H, L, hd)
        return t.reshape(B, L, num_heads, hd).transpose(0, 2, 1, 3)

    qh, kh, vh = split(q), split(k), split(v)
    s = jnp.einsum("bhqd,bhkd->bhqk", qh, kh) / jnp.sqrt(jnp.float32(hd))
    p = jax.nn.softmax(s, axis=-1)
    o = jnp.einsum("bhqk,bhkd->bhqd", p, vh)
    o = o.transpose(0, 2, 1, 3).reshape(B, L, E)
    o = o @ params["wo"].T + params["bo"][0]
    return o.reshape(B, -1, embed_size)


def make_params(key, E):
    """Deterministic synthetic MultiheadAttention parameters (not a checkpoint)."""
    ks = jax.random.split(key, 4)
    # in_proj_weight is (3E, E) in torch; split into q/k/v blocks.
    in_proj_w = jax.random.normal(ks[0], (3 * E, E), jnp.float32) * 0.1
    in_proj_b = jax.random.normal(ks[1], (3 * E,), jnp.float32) * 0.05
    wo = jax.random.normal(ks[2], (E, E), jnp.float32) * 0.1
    bo = jax.random.normal(ks[3], (E,), jnp.float32) * 0.05
    return dict(
        wq=in_proj_w[0 * E:1 * E], wk=in_proj_w[1 * E:2 * E], wv=in_proj_w[2 * E:3 * E],
        bq=in_proj_b[0 * E:1 * E].reshape(1, E),
        bk=in_proj_b[1 * E:2 * E].reshape(1, E),
        bv=in_proj_b[2 * E:3 * E].reshape(1, E),
        wo=wo, bo=bo.reshape(1, E),
    )


if __name__ == "__main__":
    # Module hyperparameters (small, consistent with the forward):
    embed_size = 4
    target_length = 16
    target_compression_length = 8          # 16 / 8 = 2 -> each_compression_embed_size
    num_heads = 2
    each_comp = target_length // target_compression_length
    E = embed_size * each_comp             # MHA embed_dim = 8
    B = 2

    key = jax.random.PRNGKey(0)
    kx, kp = jax.random.split(key)
    x = jax.random.normal(kx, (B, target_length, embed_size), jnp.float32)
    params = make_params(kp, E)

    # One-time parameter packing (fused / pre-transposed / scale-folded weights).
    packed = pack_mha_params(params, num_heads)

    out = self_attention_block_pallas(
        x, packed,
        embed_size=embed_size, target_length=target_length,
        target_compression_length=target_compression_length, num_heads=num_heads)
    out = jax.block_until_ready(out)

    ref = _reference_mha(
        x, params,
        embed_size=embed_size, target_length=target_length,
        target_compression_length=target_compression_length, num_heads=num_heads)

    assert out.shape == (B, target_length, embed_size), out.shape
    assert jnp.allclose(out, ref, atol=1e-4, rtol=1e-4), float(jnp.max(jnp.abs(out - ref)))

    print("KERNEL_OK")
</pallas_src>

<mosaic_0001>
module attributes {stable_mosaic.version = 11 : i64} {
  func.func @_mha_kernel(%arg0: memref<16x8xf32, #tpu.memory_space<vmem>>, %arg1: memref<8x24xf32, #tpu.memory_space<vmem>>, %arg2: memref<1x24xf32, #tpu.memory_space<vmem>>, %arg3: memref<8x8xf32, #tpu.memory_space<vmem>>, %arg4: memref<1x8xf32, #tpu.memory_space<vmem>>, %arg5: memref<1x128xf32, #tpu.memory_space<vmem>>) attributes {dimension_semantics = [], scalar_prefetch = 0 : i64, scratch_operands = 0 : i64, tpu.core_type = #tpu.core_type<tc>} {
    %c0 = arith.constant 0 : index
    %c0_0 = arith.constant 0 : index
    %0 = vector.load %arg0[%c0, %c0_0] : memref<16x8xf32, #tpu.memory_space<vmem>>, vector<16x8xf32>
    %c0_1 = arith.constant 0 : index
    %c0_2 = arith.constant 0 : index
    %1 = vector.load %arg1[%c0_1, %c0_2] : memref<8x24xf32, #tpu.memory_space<vmem>>, vector<8x24xf32>
    %cst = arith.constant dense<0.000000e+00> : vector<16x24xf32>
    %2 = tpu.matmul %0, %1, %cst {dimension_numbers = #tpu.dot_dimension_numbers<[1], [0], [0], [1], [0, 0, 1, 1], [], []>} : vector<16x8xf32>, vector<8x24xf32>, vector<16x24xf32> -> vector<16x24xf32>
    %c0_3 = arith.constant 0 : index
    %c0_4 = arith.constant 0 : index
    %3 = vector.load %arg2[%c0_3, %c0_4] : memref<1x24xf32, #tpu.memory_space<vmem>>, vector<1x24xf32>
    %4 = vector.broadcast %3 : vector<1x24xf32> to vector<16x24xf32>
    %5 = arith.addf %2, %4 : vector<16x24xf32>
    %6 = vector.extract_strided_slice %5 {offsets = [0, 0], sizes = [16, 4], strides = [1, 1]} : vector<16x24xf32> to vector<16x4xf32>
    %7 = vector.shape_cast %6 : vector<16x4xf32> to vector<2x8x4xf32>
    %8 = vector.extract_strided_slice %5 {offsets = [0, 4], sizes = [16, 4], strides = [1, 1]} : vector<16x24xf32> to vector<16x4xf32>
    %9 = vector.shape_cast %8 : vector<16x4xf32> to vector<2x8x4xf32>
    %10 = tpu.concatenate %7, %9 in 0 : vector<2x8x4xf32>, vector<2x8x4xf32> -> vector<4x8x4xf32>
    %11 = vector.extract_strided_slice %5 {offsets = [0, 8], sizes = [16, 4], strides = [1, 1]} : vector<16x24xf32> to vector<16x4xf32>
    %12 = vector.shape_cast %11 : vector<16x4xf32> to vector<2x8x4xf32>
    %13 = vector.extract_strided_slice %5 {offsets = [0, 12], sizes = [16, 4], strides = [1, 1]} : vector<16x24xf32> to vector<16x4xf32>
    %14 = vector.shape_cast %13 : vector<16x4xf32> to vector<2x8x4xf32>
    %15 = tpu.concatenate %12, %14 in 0 : vector<2x8x4xf32>, vector<2x8x4xf32> -> vector<4x8x4xf32>
    %16 = vector.extract_strided_slice %5 {offsets = [0, 16], sizes = [16, 4], strides = [1, 1]} : vector<16x24xf32> to vector<16x4xf32>
    %17 = vector.shape_cast %16 : vector<16x4xf32> to vector<2x8x4xf32>
    %18 = vector.extract_strided_slice %5 {offsets = [0, 20], sizes = [16, 4], strides = [1, 1]} : vector<16x24xf32> to vector<16x4xf32>
    %19 = vector.shape_cast %18 : vector<16x4xf32> to vector<2x8x4xf32>
    %20 = tpu.concatenate %17, %19 in 0 : vector<2x8x4xf32>, vector<2x8x4xf32> -> vector<4x8x4xf32>
    "tpu.trace_start"() <{level = 10 : i32, message = "bqd,bkd->bqk"}> : () -> ()
    %cst_5 = arith.constant dense<0.000000e+00> : vector<4x8x8xf32>
    %21 = tpu.matmul %10, %15, %cst_5 {dimension_numbers = #tpu.dot_dimension_numbers<[2], [2], [1], [1], [0, 0, 0, 1, 1, 1], [0], [0]>} : vector<4x8x4xf32>, vector<4x8x4xf32>, vector<4x8x8xf32> -> vector<4x8x8xf32>
    "tpu.trace_stop"() : () -> ()
    %cst_6 = arith.constant dense<0xFF800000> : vector<4x8xf32>
    %22 = vector.multi_reduction <maximumf>, %21, %cst_6 [2] : vector<4x8x8xf32> to vector<4x8xf32>
    %23 = vector.shape_cast %22 : vector<4x8xf32> to vector<4x8x1xf32>
    %24 = vector.broadcast %23 : vector<4x8x1xf32> to vector<4x8x8xf32>
    %25 = arith.subf %21, %24 : vector<4x8x8xf32>
    %26 = math.exp %25 : vector<4x8x8xf32>
    %cst_7 = arith.constant dense<0.000000e+00> : vector<4x8xf32>
    %27 = vector.multi_reduction <add>, %26, %cst_7 [2] : vector<4x8x8xf32> to vector<4x8xf32>
    %28 = vector.shape_cast %27 : vector<4x8xf32> to vector<4x8x1xf32>
    %29 = tpu.reciprocal %28 {approx = true} : vector<4x8x1xf32> -> vector<4x8x1xf32>
    %30 = arith.mulf %28, %29 : vector<4x8x1xf32>
    %cst_8 = arith.constant 2.000000e+00 : f32
    %31 = vector.broadcast %cst_8 : f32 to vector<4x8x1xf32>
    %32 = arith.subf %31, %30 : vector<4x8x1xf32>
    %33 = arith.mulf %29, %32 : vector<4x8x1xf32>
    %34 = vector.broadcast %33 : vector<4x8x1xf32> to vector<4x8x8xf32>
    %35 = arith.mulf %26, %34 : vector<4x8x8xf32>
    "tpu.trace_start"() <{level = 10 : i32, message = "bqk,bkd->bqd"}> : () -> ()
    %cst_9 = arith.constant dense<0.000000e+00> : vector<4x8x4xf32>
    %36 = tpu.matmul %35, %20, %cst_9 {dimension_numbers = #tpu.dot_dimension_numbers<[2], [1], [1], [2], [0, 0, 0, 1, 1, 2], [0], [0]>} : vector<4x8x8xf32>, vector<4x8x4xf32>, vector<4x8x4xf32> -> vector<4x8x4xf32>
    "tpu.trace_stop"() : () -> ()
    %37 = vector.extract_strided_slice %36 {offsets = [0, 0, 0], sizes = [2, 8, 4], strides = [1, 1, 1]} : vector<4x8x4xf32> to vector<2x8x4xf32>
    %38 = vector.shape_cast %37 : vector<2x8x4xf32> to vector<16x4xf32>
    %39 = vector.extract_strided_slice %36 {offsets = [2, 0, 0], sizes = [2, 8, 4], strides = [1, 1, 1]} : vector<4x8x4xf32> to vector<2x8x4xf32>
    %40 = vector.shape_cast %39 : vector<2x8x4xf32> to vector<16x4xf32>
    %41 = tpu.concatenate %38, %40 in 1 : vector<16x4xf32>, vector<16x4xf32> -> vector<16x8xf32>
    %c0_10 = arith.constant 0 : index
    %c0_11 = arith.constant 0 : index
    %42 = vector.load %arg3[%c0_10, %c0_11] : memref<8x8xf32, #tpu.memory_space<vmem>>, vector<8x8xf32>
    %cst_12 = arith.constant dense<0.000000e+00> : vector<16x8xf32>
    %43 = tpu.matmul %41, %42, %cst_12 {dimension_numbers = #tpu.dot_dimension_numbers<[1], [0], [0], [1], [0, 0, 1, 1], [], []>} : vector<16x8xf32>, vector<8x8xf32>, vector<16x8xf32> -> vector<16x8xf32>
    %c0_13 = arith.constant 0 : index
    %c0_14 = arith.constant 0 : index
    %44 = vector.load %arg4[%c0_13, %c0_14] : memref<1x8xf32, #tpu.memory_space<vmem>>, vector<1x8xf32>
    %45 = vector.broadcast %44 : vector<1x8xf32> to vector<16x8xf32>
    %46 = arith.addf %43, %45 : vector<16x8xf32>
    %47 = vector.shape_cast %46 : vector<16x8xf32> to vector<1x128xf32>
    %c0_15 = arith.constant 0 : index
    %c0_16 = arith.constant 0 : index
    %48 = vector.load %arg5[%c0_15, %c0_16] : memref<1x128xf32, #tpu.memory_space<vmem>>, vector<1x128xf32>
    tpu.vector_store %arg5[%c0_15, %c0_16], %47 {strides = array<i32>} : memref<1x128xf32, #tpu.memory_space<vmem>>, vector<1x128xf32>,
    return
  }
}

module attributes {stable_mosaic.version = 11 : i64} {
  func.func @_mha_kernel(%arg0: memref<16x8xf32, #tpu.memory_space<vmem>>, %arg1: memref<8x24xf32, #tpu.memory_space<vmem>>, %arg2: memref<1x24xf32, #tpu.memory_space<vmem>>, %arg3: memref<8x8xf32, #tpu.memory_space<vmem>>, %arg4: memref<1x8xf32, #tpu.memory_space<vmem>>, %arg5: memref<16x8xf32, #tpu.memory_space<vmem>>) attributes {dimension_semantics = [], scalar_prefetch = 0 : i64, scratch_operands = 0 : i64, tpu.core_type = #tpu.core_type<tc>} {
    %c0 = arith.constant 0 : index
    %c0_0 = arith.constant 0 : index
    %0 = vector.load %arg0[%c0, %c0_0] : memref<16x8xf32, #tpu.memory_space<vmem>>, vector<16x8xf32>
    %c0_1 = arith.constant 0 : index
    %c0_2 = arith.constant 0 : index
    %1 = vector.load %arg1[%c0_1, %c0_2] : memref<8x24xf32, #tpu.memory_space<vmem>>, vector<8x24xf32>
    %cst = arith.constant dense<0.000000e+00> : vector<16x24xf32>
    %2 = tpu.matmul %0, %1, %cst {dimension_numbers = #tpu.dot_dimension_numbers<[1], [0], [0], [1], [0, 0, 1, 1], [], []>} : vector<16x8xf32>, vector<8x24xf32>, vector<16x24xf32> -> vector<16x24xf32>
    %c0_3 = arith.constant 0 : index
    %c0_4 = arith.constant 0 : index
    %3 = vector.load %arg2[%c0_3, %c0_4] : memref<1x24xf32, #tpu.memory_space<vmem>>, vector<1x24xf32>
    %4 = vector.broadcast %3 : vector<1x24xf32> to vector<16x24xf32>
    %5 = arith.addf %2, %4 : vector<16x24xf32>
    %6 = vector.extract_strided_slice %5 {offsets = [0, 0], sizes = [16, 4], strides = [1, 1]} : vector<16x24xf32> to vector<16x4xf32>
    %7 = vector.shape_cast %6 : vector<16x4xf32> to vector<2x8x4xf32>
    %8 = vector.extract_strided_slice %5 {offsets = [0, 4], sizes = [16, 4], strides = [1, 1]} : vector<16x24xf32> to vector<16x4xf32>
    %9 = vector.shape_cast %8 : vector<16x4xf32> to vector<2x8x4xf32>
    %10 = tpu.concatenate %7, %9 in 0 : vector<2x8x4xf32>, vector<2x8x4xf32> -> vector<4x8x4xf32>
    %11 = vector.extract_strided_slice %5 {offsets = [0, 8], sizes = [16, 4], strides = [1, 1]} : vector<16x24xf32> to vector<16x4xf32>
    %12 = vector.shape_cast %11 : vector<16x4xf32> to vector<2x8x4xf32>
    %13 = vector.extract_strided_slice %5 {offsets = [0, 12], sizes = [16, 4], strides = [1, 1]} : vector<16x24xf32> to vector<16x4xf32>
    %14 = vector.shape_cast %13 : vector<16x4xf32> to vector<2x8x4xf32>
    %15 = tpu.concatenate %12, %14 in 0 : vector<2x8x4xf32>, vector<2x8x4xf32> -> vector<4x8x4xf32>
    %16 = vector.extract_strided_slice %5 {offsets = [0, 16], sizes = [16, 4], strides = [1, 1]} : vector<16x24xf32> to vector<16x4xf32>
    %17 = vector.shape_cast %16 : vector<16x4xf32> to vector<2x8x4xf32>
    %18 = vector.extract_strided_slice %5 {offsets = [0, 20], sizes = [16, 4], strides = [1, 1]} : vector<16x24xf32> to vector<16x4xf32>
    %19 = vector.shape_cast %18 : vector<16x4xf32> to vector<2x8x4xf32>
    %20 = tpu.concatenate %17, %19 in 0 : vector<2x8x4xf32>, vector<2x8x4xf32> -> vector<4x8x4xf32>
    "tpu.trace_start"() <{level = 10 : i32, message = "bqd,bkd->bqk"}> : () -> ()
    %cst_5 = arith.constant dense<0.000000e+00> : vector<4x8x8xf32>
    %21 = tpu.matmul %10, %15, %cst_5 {dimension_numbers = #tpu.dot_dimension_numbers<[2], [2], [1], [1], [0, 0, 0, 1, 1, 1], [0], [0]>} : vector<4x8x4xf32>, vector<4x8x4xf32>, vector<4x8x8xf32> -> vector<4x8x8xf32>
    "tpu.trace_stop"() : () -> ()
    %cst_6 = arith.constant dense<0xFF800000> : vector<4x8xf32>
    %22 = vector.multi_reduction <maximumf>, %21, %cst_6 [2] : vector<4x8x8xf32> to vector<4x8xf32>
    %23 = vector.shape_cast %22 : vector<4x8xf32> to vector<4x8x1xf32>
    %24 = vector.broadcast %23 : vector<4x8x1xf32> to vector<4x8x8xf32>
    %25 = arith.subf %21, %24 : vector<4x8x8xf32>
    %26 = math.exp %25 : vector<4x8x8xf32>
    %cst_7 = arith.constant dense<0.000000e+00> : vector<4x8xf32>
    %27 = vector.multi_reduction <add>, %26, %cst_7 [2] : vector<4x8x8xf32> to vector<4x8xf32>
    %28 = vector.shape_cast %27 : vector<4x8xf32> to vector<4x8x1xf32>
    %29 = tpu.reciprocal %28 {approx = true} : vector<4x8x1xf32> -> vector<4x8x1xf32>
    %30 = arith.mulf %28, %29 : vector<4x8x1xf32>
    %cst_8 = arith.constant 2.000000e+00 : f32
    %31 = vector.broadcast %cst_8 : f32 to vector<4x8x1xf32>
    %32 = arith.subf %31, %30 : vector<4x8x1xf32>
    %33 = arith.mulf %29, %32 : vector<4x8x1xf32>
    %34 = vector.broadcast %33 : vector<4x8x1xf32> to vector<4x8x8xf32>
    %35 = arith.mulf %26, %34 : vector<4x8x8xf32>
    "tpu.trace_start"() <{level = 10 : i32, message = "bqk,bkd->bqd"}> : () -> ()
    %cst_9 = arith.constant dense<0.000000e+00> : vector<4x8x4xf32>
    %36 = tpu.matmul %35, %20, %cst_9 {dimension_numbers = #tpu.dot_dimension_numbers<[2], [1], [1], [2], [0, 0, 0, 1, 1, 2], [0], [0]>} : vector<4x8x8xf32>, vector<4x8x4xf32>, vector<4x8x4xf32> -> vector<4x8x4xf32>
    "tpu.trace_stop"() : () -> ()
    %37 = vector.extract_strided_slice %36 {offsets = [0, 0, 0], sizes = [2, 8, 4], strides = [1, 1, 1]} : vector<4x8x4xf32> to vector<2x8x4xf32>
    %38 = vector.shape_cast %37 : vector<2x8x4xf32> to vector<16x4xf32>
    %39 = vector.extract_strided_slice %36 {offsets = [2, 0, 0], sizes = [2, 8, 4], strides = [1, 1, 1]} : vector<4x8x4xf32> to vector<2x8x4xf32>
    %40 = vector.shape_cast %39 : vector<2x8x4xf32> to vector<16x4xf32>
    %41 = tpu.concatenate %38, %40 in 1 : vector<16x4xf32>, vector<16x4xf32> -> vector<16x8xf32>
    %c0_10 = arith.constant 0 : index
    %c0_11 = arith.constant 0 : index
    %42 = vector.load %arg3[%c0_10, %c0_11] : memref<8x8xf32, #tpu.memory_space<vmem>>, vector<8x8xf32>
    %cst_12 = arith.constant dense<0.000000e+00> : vector<16x8xf32>
    %43 = tpu.matmul %41, %42, %cst_12 {dimension_numbers = #tpu.dot_dimension_numbers<[1], [0], [0], [1], [0, 0, 1, 1], [], []>} : vector<16x8xf32>, vector<8x8xf32>, vector<16x8xf32> -> vector<16x8xf32>
    %c0_13 = arith.constant 0 : index
    %c0_14 = arith.constant 0 : index
    %44 = vector.load %arg4[%c0_13, %c0_14] : memref<1x8xf32, #tpu.memory_space<vmem>>, vector<1x8xf32>
    %45 = vector.broadcast %44 : vector<1x8xf32> to vector<16x8xf32>
    %46 = arith.addf %43, %45 : vector<16x8xf32>
    %c0_15 = arith.constant 0 : index
    %c0_16 = arith.constant 0 : index
    %47 = vector.load %arg5[%c0_15, %c0_16] : memref<16x8xf32, #tpu.memory_space<vmem>>, vector<16x8xf32>
    tpu.vector_store %arg5[%c0_15, %c0_16], %46 {strides = array<i32>} : memref<16x8xf32, #tpu.memory_space<vmem>>, vector<16x8xf32>,
    return
  }
}

</mosaic_0001>

<llo_original>
// kernel: tpu_custom_call.1
$region0: #{tpu_custom_call.1}
  #allocation0 [shape = 'u32[]', space=smem, size = 0x4, offset = 0x4, fixed_abs, tag = 'smem constant byte address 0x4 - core index']
  #allocation1 [shape = 'u32[72,128]{1,0:T(1,128)}', space=vmem, size = 0x9000, scoped, tag = 'internal scratch']
  %s0 = inlined_call_operand.vmem [shape: f32[16,8], index: 0, kind: input, shape index: {}]
  %s1 = inlined_call_operand.vmem [shape: f32[8,24], index: 1, kind: input, shape index: {}]
  %s2 = inlined_call_operand.vmem [shape: f32[1,24], index: 2, kind: input, shape index: {}]
  %s3 = inlined_call_operand.vmem [shape: f32[8,8], index: 3, kind: input, shape index: {}]
  %s4 = inlined_call_operand.vmem [shape: f32[1,8], index: 4, kind: input, shape index: {}]
  %s5 = inlined_call_operand.vmem [shape: f32[16,8], index: 5, kind: output, shape index: {}]
  %s6 = sld [smem:[#allocation0]]
  $region30: #{tpu_custom_call.1} parent=0
    _
  %s8 = ssub.s32 1, %s6
  %s9 = scalar_select 0, %s8, %s6
  // Predicated region
  $region2: #{tpu_custom_call.1} parent=0 // pred_check
    _
  $region3: #{tpu_custom_call.1} parent=0 // pred_check_branch
    %11 = sbr.rel (0) target = $region5
  $region4: #{tpu_custom_call.1} parent=0 // pred_region
    _
  $region5: #{tpu_custom_call.1} parent=0 // pred_fallthru
    _
  // Predicated region
  $region6: #{tpu_custom_call.1} parent=0 // pred_check
    _
  $region7: #{tpu_custom_call.1} parent=0 // pred_check_branch
    %13 = sbr.rel (0) target = $region9
  $region8: #{tpu_custom_call.1} parent=0 // pred_region
    _
  $region9: #{tpu_custom_call.1} parent=0 // pred_fallthru
    _
  // Predicated region
  $region10: #{tpu_custom_call.1} parent=0 // pred_check
    _
  $region11: #{tpu_custom_call.1} parent=0 // pred_check_branch
    %15 = sbr.rel (0) target = $region13
  $region12: #{tpu_custom_call.1} parent=0 // pred_region
    _
  $region13: #{tpu_custom_call.1} parent=0 // pred_fallthru
    _
  // Predicated region
  $region14: #{tpu_custom_call.1} parent=0 // pred_check
    _
  $region15: #{tpu_custom_call.1} parent=0 // pred_check_branch
    %17 = sbr.rel (0) target = $region17
  $region16: #{tpu_custom_call.1} parent=0 // pred_region
    _
  $region17: #{tpu_custom_call.1} parent=0 // pred_fallthru
    _
  // Predicated region
  $region18: #{tpu_custom_call.1} parent=0 // pred_check
    _
  $region19: #{tpu_custom_call.1} parent=0 // pred_check_branch
    %19 = sbr.rel (0) target = $region21
  $region20: #{tpu_custom_call.1} parent=0 // pred_region
    _
  $region21: #{tpu_custom_call.1} parent=0 // pred_fallthru
    _
  %v20 = vld [vmem:[%s0] sm:$0xff]
  %v21 = vld [vmem:[%s0 + $0x8] sm:$0xff]
  %v22 = vld [vmem:[%s1] sm:$0xff]
  %v23 = vld [vmem:[%s2] sm:$0x1]
  %v25 = vperm.slane %v23, 0
  %vm27 = vcmask 64512
  %v29 = vsel %vm27, %v20, 0
  %v32 = vsel %vm27, %v21, 0
  %34 = vmatpush.msra.mxu0 0.0
  %35 = vmatpush.msra.mxu0 0.0
  %36 = vmatpush.msra.mxu0 0.0
  %37 = vmatpush.msra.mxu0 0.0
  %38 = vmatpush.msra.mxu0 0.0
  %39 = vmatpush.msra.mxu0 0.0
  %40 = vmatpush.msra.mxu0 0.0
  %41 = vmatpush.msra.mxu0 0.0
  %42 = vmatpush.msra.mxu0 0.0
  %43 = vmatpush.msra.mxu0 0.0
  %44 = vmatpush.msra.mxu0 0.0
  %45 = vmatpush.msra.mxu0 0.0
  %46 = vmatpush.msra.mxu0 0.0
  %47 = vmatpush.msra.mxu0 0.0
  %48 = vmatpush.msra.mxu0 0.0
  %49 = vmatpush.msra.mxu0 %v22
  %50 = vmatmul.f32.gmra.mxu0 %v29
  %v51 = vpop.f32.mrf.mxu0
  %v52 = vadd.f32 %v25, %v51
  %53 = vmatmul.f32.gmra.mxu0 %v32
  %v54 = vpop.f32.mrf.mxu0
  %v55 = vadd.f32 %v25, %v54
  %56 = vdwg.mxu0
  %59 = vrot.lane.b32.xlu0 %v52, 124
  %v60 = vpop.permute.xlu0 %59
  %61 = vrot.lane.b32.xlu0 %v55, 124
  %v62 = vpop.permute.xlu0 %61
  %63 = vrot.lane.b32.xlu0 %v52, 120
  %v64 = vpop.permute.xlu0 %63
  %vm65 = vcmask 31744
  %v66 = vsel %vm65, %v52, 0
  %v68 = vsel %vm65, %v64, 0
  %70 = vmatpush.xpose.msra.mxu0 0.0
  %71 = vmatpush.xpose.msra.mxu0 0.0
  %72 = vmatpush.xpose.msra.mxu0 0.0
  %73 = vmatpush.xpose.msra.mxu0 0.0
  %74 = vmatpush.xpose.msra.mxu0 0.0
  %75 = vmatpush.xpose.msra.mxu0 0.0
  %76 = vmatpush.xpose.msra.mxu0 0.0
  %77 = vmatpush.xpose.msra.mxu0 0.0
  %78 = vmatpush.xpose.msra.mxu0 0.0
  %79 = vmatpush.xpose.msra.mxu0 0.0
  %80 = vmatpush.xpose.msra.mxu0 0.0
  %81 = vmatpush.xpose.msra.mxu0 0.0
  %82 = vmatpush.xpose.msra.mxu0 0.0
  %83 = vmatpush.xpose.msra.mxu0 0.0
  %84 = vmatpush.xpose.msra.mxu0 0.0
  %85 = vmatpush.xpose.msra.mxu0 %v68
  %86 = vmatmul.f32.gmra.mxu0 %v66
  %v87 = vpop.f32.mrf.mxu0
  %v88 = vadd.f32 0.0, %v87
  %89 = vdwg.mxu0
  %90 = vrot.lane.b32.xlu0 %v55, 120
  %v91 = vpop.permute.xlu0 %90
  %v92 = vsel %vm65, %v55, 0
  %v94 = vsel %vm65, %v91, 0
  %96 = vmatpush.xpose.msra.mxu0 0.0
  %97 = vmatpush.xpose.msra.mxu0 0.0
  %98 = vmatpush.xpose.msra.mxu0 0.0
  %99 = vmatpush.xpose.msra.mxu0 0.0
  %100 = vmatpush.xpose.msra.mxu0 0.0
  %101 = vmatpush.xpose.msra.mxu0 0.0
  %102 = vmatpush.xpose.msra.mxu0 0.0
  %103 = vmatpush.xpose.msra.mxu0 0.0
  %104 = vmatpush.xpose.msra.mxu0 0.0
  %105 = vmatpush.xpose.msra.mxu0 0.0
  %106 = vmatpush.xpose.msra.mxu0 0.0
  %107 = vmatpush.xpose.msra.mxu0 0.0
  %108 = vmatpush.xpose.msra.mxu0 0.0
  %109 = vmatpush.xpose.msra.mxu0 0.0
  %110 = vmatpush.xpose.msra.mxu0 0.0
  %111 = vmatpush.xpose.msra.mxu0 %v94
  %112 = vmatmul.f32.gmra.mxu0 %v92
  %v113 = vpop.f32.mrf.mxu0
  %v114 = vadd.f32 0.0, %v113
  %115 = vdwg.mxu0
  %116 = vrot.lane.b32.xlu0 %v60, 120
  %v117 = vpop.permute.xlu0 %116
  %v118 = vsel %vm65, %v60, 0
  %v120 = vsel %vm65, %v117, 0
  %122 = vmatpush.xpose.msra.mxu0 0.0
  %123 = vmatpush.xpose.msra.mxu0 0.0
  %124 = vmatpush.xpose.msra.mxu0 0.0
  %125 = vmatpush.xpose.msra.mxu0 0.0
  %126 = vmatpush.xpose.msra.mxu0 0.0
  %127 = vmatpush.xpose.msra.mxu0 0.0
  %128 = vmatpush.xpose.msra.mxu0 0.0
  %129 = vmatpush.xpose.msra.mxu0 0.0
  %130 = vmatpush.xpose.msra.mxu0 0.0
  %131 = vmatpush.xpose.msra.mxu0 0.0
  %132 = vmatpush.xpose.msra.mxu0 0.0
  %133 = vmatpush.xpose.msra.mxu0 0.0
  %134 = vmatpush.xpose.msra.mxu0 0.0
  %135 = vmatpush.xpose.msra.mxu0 0.0
  %136 = vmatpush.xpose.msra.mxu0 0.0
  %137 = vmatpush.xpose.msra.mxu0 %v120
  %138 = vmatmul.f32.gmra.mxu0 %v118
  %v139 = vpop.f32.mrf.mxu0
  %v140 = vadd.f32 0.0, %v139
  %141 = vdwg.mxu0
  %142 = vrot.lane.b32.xlu0 %v62, 120
  %v143 = vpop.permute.xlu0 %142
  %v144 = vsel %vm65, %v62, 0
  %v146 = vsel %vm65, %v143, 0
  %148 = vmatpush.xpose.msra.mxu0 0.0
  %149 = vmatpush.xpose.msra.mxu0 0.0
  %150 = vmatpush.xpose.msra.mxu0 0.0
  %151 = vmatpush.xpose.msra.mxu0 0.0
  %152 = vmatpush.xpose.msra.mxu0 0.0
  %153 = vmatpush.xpose.msra.mxu0 0.0
  %154 = vmatpush.xpose.msra.mxu0 0.0
  %155 = vmatpush.xpose.msra.mxu0 0.0
  %156 = vmatpush.xpose.msra.mxu0 0.0
  %157 = vmatpush.xpose.msra.mxu0 0.0
  %158 = vmatpush.xpose.msra.mxu0 0.0
  %159 = vmatpush.xpose.msra.mxu0 0.0
  %160 = vmatpush.xpose.msra.mxu0 0.0
  %161 = vmatpush.xpose.msra.mxu0 0.0
  %162 = vmatpush.xpose.msra.mxu0 0.0
  %163 = vmatpush.xpose.msra.mxu0 %v146
  %164 = vmatmul.f32.gmra.mxu0 %v144
  %v165 = vpop.f32.mrf.mxu0
  %v166 = vadd.f32 0.0, %v165
  %167 = vdwg.mxu0
  %v168 = vsel %vm27, %v88, -inf
  %169 = vmax.xlane.f32.xlu0 %v168
  %v170 = vpop.xlane.xlu0 %169
  %v171 = vsel %vm27, %v114, -inf
  %172 = vmax.xlane.f32.xlu0 %v171
  %v173 = vpop.xlane.xlu0 %172
  %v174 = vsel %vm27, %v140, -inf
  %175 = vmax.xlane.f32.xlu0 %v174
  %v176 = vpop.xlane.xlu0 %175
  %v177 = vsel %vm27, %v166, -inf
  %178 = vmax.xlane.f32.xlu0 %v177
  %v179 = vpop.xlane.xlu0 %178
  %v180 = vsub.f32 %v88, %v170
  %v181 = vsub.f32 %v114, %v173
  %v182 = vsub.f32 %v140, %v176
  %v183 = vsub.f32 %v166, %v179
  %v184 = vmul.f32 %v180, 1.442695
  %v185 = vpow.pop %v184
  %v186 = vmul.f32 %v181, 1.442695
  %v187 = vpow.pop %v186
  %v188 = vmul.f32 %v182, 1.442695
  %v189 = vpow.pop %v188
  %v190 = vmul.f32 %v183, 1.442695
  %v191 = vpow.pop %v190
  %v192 = vsel %vm27, %v185, 0.0
  %193 = vadd.xlane.f32.xlu0 %v192
  %v194 = vpop.xlane.xlu0 %193
  %v195 = vsel %vm27, %v187, 0.0
  %196 = vadd.xlane.f32.xlu0 %v195
  %v197 = vpop.xlane.xlu0 %196
  %v198 = vsel %vm27, %v189, 0.0
  %199 = vadd.xlane.f32.xlu0 %v198
  %v200 = vpop.xlane.xlu0 %199
  %v201 = vsel %vm27, %v191, 0.0
  %202 = vadd.xlane.f32.xlu0 %v201
  %v203 = vpop.xlane.xlu0 %202
  %v204 = vrcp.pop %v194
  %v205 = vrcp.pop %v197
  %v206 = vrcp.pop %v200
  %v207 = vrcp.pop %v203
  %v208 = vmul.f32 %v194, %v204
  %v209 = vmul.f32 %v197, %v205
  %v210 = vmul.f32 %v200, %v206
  %v211 = vmul.f32 %v203, %v207
  %v212 = vsub.f32 2.0, %v208
  %v213 = vsub.f32 2.0, %v209
  %v214 = vsub.f32 2.0, %v210
  %v215 = vsub.f32 2.0, %v211
  %v216 = vmul.f32 %v204, %v212
  %v217 = vmul.f32 %v205, %v213
  %v218 = vmul.f32 %v206, %v214
  %v219 = vmul.f32 %v207, %v215
  %v220 = vmul.f32 %v185, %v216
  %v221 = vmul.f32 %v187, %v217
  %v222 = vmul.f32 %v189, %v218
  %v223 = vmul.f32 %v191, %v219
  %224 = vrot.lane.b32.xlu0 %v52, 112
  %v225 = vpop.permute.xlu0 %224
  %v228 = vsel %vm27, %v220, 0
  %230 = vmatpush.msra.mxu0 0.0
  %231 = vmatpush.msra.mxu0 0.0
  %232 = vmatpush.msra.mxu0 0.0
  %233 = vmatpush.msra.mxu0 0.0
  %234 = vmatpush.msra.mxu0 0.0
  %235 = vmatpush.msra.mxu0 0.0
  %236 = vmatpush.msra.mxu0 0.0
  %237 = vmatpush.msra.mxu0 0.0
  %238 = vmatpush.msra.mxu0 0.0
  %239 = vmatpush.msra.mxu0 0.0
  %240 = vmatpush.msra.mxu0 0.0
  %241 = vmatpush.msra.mxu0 0.0
  %242 = vmatpush.msra.mxu0 0.0
  %243 = vmatpush.msra.mxu0 0.0
  %244 = vmatpush.msra.mxu0 0.0
  %245 = vmatpush.msra.mxu0 %v225
  %246 = vmatmul.f32.gmra.mxu0 %v228
  %v247 = vpop.f32.mrf.mxu0
  %v248 = vadd.f32 0.0, %v247
  %249 = vdwg.mxu0
  %250 = vrot.lane.b32.xlu0 %v55, 112
  %v251 = vpop.permute.xlu0 %250
  %v254 = vsel %vm27, %v221, 0
  %256 = vmatpush.msra.mxu0 0.0
  %257 = vmatpush.msra.mxu0 0.0
  %258 = vmatpush.msra.mxu0 0.0
  %259 = vmatpush.msra.mxu0 0.0
  %260 = vmatpush.msra.mxu0 0.0
  %261 = vmatpush.msra.mxu0 0.0
  %262 = vmatpush.msra.mxu0 0.0
  %263 = vmatpush.msra.mxu0 0.0
  %264 = vmatpush.msra.mxu0 0.0
  %265 = vmatpush.msra.mxu0 0.0
  %266 = vmatpush.msra.mxu0 0.0
  %267 = vmatpush.msra.mxu0 0.0
  %268 = vmatpush.msra.mxu0 0.0
  %269 = vmatpush.msra.mxu0 0.0
  %270 = vmatpush.msra.mxu0 0.0
  %271 = vmatpush.msra.mxu0 %v251
  %272 = vmatmul.f32.gmra.mxu0 %v254
  %v273 = vpop.f32.mrf.mxu0
  %v274 = vadd.f32 0.0, %v273
  %275 = vdwg.mxu0
  %276 = vrot.lane.b32.xlu0 %v60, 112
  %v277 = vpop.permute.xlu0 %276
  %v280 = vsel %vm27, %v222, 0
  %282 = vmatpush.msra.mxu0 0.0
  %283 = vmatpush.msra.mxu0 0.0
  %284 = vmatpush.msra.mxu0 0.0
  %285 = vmatpush.msra.mxu0 0.0
  %286 = vmatpush.msra.mxu0 0.0
  %287 = vmatpush.msra.mxu0 0.0
  %288 = vmatpush.msra.mxu0 0.0
  %289 = vmatpush.msra.mxu0 0.0
  %290 = vmatpush.msra.mxu0 0.0
  %291 = vmatpush.msra.mxu0 0.0
  %292 = vmatpush.msra.mxu0 0.0
  %293 = vmatpush.msra.mxu0 0.0
  %294 = vmatpush.msra.mxu0 0.0
  %295 = vmatpush.msra.mxu0 0.0
  %296 = vmatpush.msra.mxu0 0.0
  %297 = vmatpush.msra.mxu0 %v277
  %298 = vmatmul.f32.gmra.mxu0 %v280
  %v299 = vpop.f32.mrf.mxu0
  %v300 = vadd.f32 0.0, %v299
  %301 = vdwg.mxu0
  %302 = vrot.lane.b32.xlu0 %v62, 112
  %v303 = vpop.permute.xlu0 %302
  %v306 = vsel %vm27, %v223, 0
  %308 = vmatpush.msra.mxu0 0.0
  %309 = vmatpush.msra.mxu0 0.0
  %310 = vmatpush.msra.mxu0 0.0
  %311 = vmatpush.msra.mxu0 0.0
  %312 = vmatpush.msra.mxu0 0.0
  %313 = vmatpush.msra.mxu0 0.0
  %314 = vmatpush.msra.mxu0 0.0
  %315 = vmatpush.msra.mxu0 0.0
  %316 = vmatpush.msra.mxu0 0.0
  %317 = vmatpush.msra.mxu0 0.0
  %318 = vmatpush.msra.mxu0 0.0
  %319 = vmatpush.msra.mxu0 0.0
  %320 = vmatpush.msra.mxu0 0.0
  %321 = vmatpush.msra.mxu0 0.0
  %322 = vmatpush.msra.mxu0 0.0
  %323 = vmatpush.msra.mxu0 %v303
  %324 = vmatmul.f32.gmra.mxu0 %v306
  %v325 = vpop.f32.mrf.mxu0
  %v326 = vadd.f32 0.0, %v325
  %327 = vdwg.mxu0
  %330 = vrot.lane.b32.xlu0 %v300, 4
  %v331 = vpop.permute.xlu0 %330
  %332 = vrot.lane.b32.xlu0 %v326, 4
  %v333 = vpop.permute.xlu0 %332
  %v336 = vsel %vm65, %v248, %v331
  %v337 = vsel %vm65, %v274, %v333
  %v338 = vld [vmem:[%s3] sm:$0xff]
  %v339 = vld [vmem:[%s4] sm:$0x1]
  %v341 = vperm.slane %v339, 0
  %v344 = vsel %vm27, %v336, 0
  %v347 = vsel %vm27, %v337, 0
  %349 = vmatpush.msra.mxu0 0.0
  %350 = vmatpush.msra.mxu0 0.0
  %351 = vmatpush.msra.mxu0 0.0
  %352 = vmatpush.msra.mxu0 0.0
  %353 = vmatpush.msra.mxu0 0.0
  %354 = vmatpush.msra.mxu0 0.0
  %355 = vmatpush.msra.mxu0 0.0
  %356 = vmatpush.msra.mxu0 0.0
  %357 = vmatpush.msra.mxu0 0.0
  %358 = vmatpush.msra.mxu0 0.0
  %359 = vmatpush.msra.mxu0 0.0
  %360 = vmatpush.msra.mxu0 0.0
  %361 = vmatpush.msra.mxu0 0.0
  %362 = vmatpush.msra.mxu0 0.0
  %363 = vmatpush.msra.mxu0 0.0
  %364 = vmatpush.msra.mxu0 %v338
  %365 = vmatmul.f32.gmra.mxu0 %v344
  %v366 = vpop.f32.mrf.mxu0
  %v367 = vadd.f32 %v341, %v366
  %368 = vmatmul.f32.gmra.mxu0 %v347
  %v369 = vpop.f32.mrf.mxu0
  %v370 = vadd.f32 %v341, %v369
  %371 = vdwg.mxu0
  %372 = vst.msk [vmem:[%s5] sm:$0xff] %vm27, %v367
  %373 = vst.msk [vmem:[%s5 + $0x8] sm:$0xff] %vm27, %v370
  // Predicated region
  $region22: #{tpu_custom_call.1} parent=0 // pred_check
    _
  $region23: #{tpu_custom_call.1} parent=0 // pred_check_branch
    %375 = sbr.rel (0) target = $region25
  $region24: #{tpu_custom_call.1} parent=0 // pred_region
    _
  $region25: #{tpu_custom_call.1} parent=0 // pred_fallthru
    _
  // Predicated region
  $region26: #{tpu_custom_call.1} parent=0 // pred_check
    _
  $region27: #{tpu_custom_call.1} parent=0 // pred_check_branch
    %377 = sbr.rel (0) target = $region29
  $region28: #{tpu_custom_call.1} parent=0 // pred_region
    _
  $region29: #{tpu_custom_call.1} parent=0 // pred_fallthru
    _

</llo_original>
